<compile_context>
chip_gen: v7x
topology: tpu7x:2x2x1
jax: 0.10.0
libtpu: 0.0.40
codegen_flags: <defaults>
</compile_context>

<pallas_src>
import math

import jax
import jax.numpy as jnp
from jax.experimental import pallas as pl
from jax.experimental.pallas import tpu as pltpu

_MiB = 1024 * 1024
_DMA_INFLIGHT = 32           # row-gather DMAs kept in flight per tile (power of two)

# Per-generation knobs:
#   scoped_vmem_cap   : vmem_limit_bytes handed to Mosaic (leaves compiler headroom)
#   resident_2x_budget: cap on 2*table_bytes (Pallas double-buffers even constant blocks)
#   onehot_max_vocab  : MXU one-hot gather crossover (v6e/v7x MXUs push it past 2048)
#   tile_tokens       : tokens per grid step (amortizes ~0.35us/step; smaller on v7x)
_GEN_CONFIG = {
    "v5e": dict(scoped_vmem_cap=100 * _MiB, resident_2x_budget=48 * _MiB,
                onehot_max_vocab=2048, tile_tokens=512),
    "v6e": dict(scoped_vmem_cap=100 * _MiB, resident_2x_budget=48 * _MiB,
                onehot_max_vocab=8192, tile_tokens=512),
    "v7x": dict(scoped_vmem_cap=48 * _MiB, resident_2x_budget=20 * _MiB,
                onehot_max_vocab=8192, tile_tokens=256),
}


def _tpu_generation():
    try:
        kind = jax.devices()[0].device_kind.lower()
    except Exception:
        return "v6e"
    if "v7" in kind:
        return "v7x"
    if "v5" in kind:
        return "v5e"
    return "v6e"


# ---------------------------------------------------------------------------
# Path A: table resident in VMEM, gather via one-hot matmul on the MXU.
# ---------------------------------------------------------------------------
def _embed_onehot_kernel(idx_ref, table_ref, out_ref):
    # idx_ref:   (T, 1) int32 token ids for this tile (VMEM)
    # table_ref: (V, D) full embedding table (VMEM, constant block)
    # out_ref:   (T, D) gathered rows (lane/sublane-dense tile)
    t_tokens = idx_ref.shape[0]
    vocab = table_ref.shape[0]
    ids = idx_ref[...]                                                    # (T, 1)
    one_hot = ids == jax.lax.broadcasted_iota(jnp.int32, (t_tokens, vocab), 1)
    # 0/1 is exact in any float dtype; matching the table dtype keeps bf16 tables on
    # the full-rate MXU path.  For f32 tables Mosaic's f32 matmul lowering was
    # verified bit-accurate enough for a gather (asserted against jnp.take below).
    one_hot = one_hot.astype(table_ref.dtype)                             # (T, V)
    gathered = jnp.dot(one_hot, table_ref[...],
                       preferred_element_type=jnp.float32)                # (T, D) f32
    out_ref[...] = gathered.astype(out_ref.dtype)


def _lookup_resident(flat_idx, table, tile_tokens, vmem_limit_bytes):
    n_pad = flat_idx.shape[0]
    v, d = table.shape
    itemsize = table.dtype.itemsize
    cost = pl.CostEstimate(
        flops=int(2 * n_pad * v * d),
        transcendentals=0,
        bytes_accessed=int(v * d * itemsize + n_pad * d * itemsize + 4 * n_pad),
    )
    return pl.pallas_call(
        _embed_onehot_kernel,
        out_shape=jax.ShapeDtypeStruct((n_pad, d), table.dtype),
        grid_spec=pltpu.PrefetchScalarGridSpec(
            num_scalar_prefetch=0,
            grid=(n_pad // tile_tokens,),
            in_specs=[
                pl.BlockSpec((tile_tokens, 1), lambda i: (i, 0)),
                pl.BlockSpec((v, d), lambda i: (0, 0)),       # constant block
            ],
            out_specs=pl.BlockSpec((tile_tokens, d), lambda i: (i, 0)),
        ),
        compiler_params=pltpu.CompilerParams(
            dimension_semantics=("parallel",),                 # 2 TCs on v7x
            vmem_limit_bytes=int(vmem_limit_bytes),
        ),
        cost_estimate=cost,
    )(flat_idx.reshape(n_pad, 1), table)


# ---------------------------------------------------------------------------
# Path B: table left in HBM, per-tile manual multi-DMA row gather into out_ref.
# ---------------------------------------------------------------------------
def _embed_dma_gather_kernel(idx_hbm, table_hbm, out_ref, idx_smem, idx_sem, row_sems):
    # idx_hbm:   (Npad,) int32 token ids, left in HBM (memory_space=pl.ANY)
    # table_hbm: (V, D)  embedding table, left in HBM (memory_space=pl.ANY)
    # out_ref:   (T, D)  output block (VMEM) -- row DMAs land here directly
    # idx_smem:  (T,)    int32 SMEM scratch for this tile's token ids
    # idx_sem:   (1,)    DMA semaphore for the index copy
    # row_sems:  (_DMA_INFLIGHT,) DMA semaphores for the row gathers, round-robin
    t_tokens = out_ref.shape[0]
    tile = pl.program_id(0)

    # 1) this tile's token ids: one small HBM->SMEM copy (O(T), batch-size independent)
    idx_cp = pltpu.make_async_copy(
        idx_hbm.at[pl.ds(tile * t_tokens, t_tokens)], idx_smem, idx_sem.at[0])
    idx_cp.start()
    idx_cp.wait()

    n_prime = min(_DMA_INFLIGHT, t_tokens)
    slot_mask = _DMA_INFLIGHT - 1

    def _start_row(t, row):
        pltpu.make_async_copy(table_hbm.at[row], out_ref.at[t],
                              row_sems.at[t & slot_mask]).start()

    def _wait_row(t):
        pltpu.make_async_copy(table_hbm.at[0], out_ref.at[t],
                              row_sems.at[t & slot_mask]).wait()

    # 2) prime the gather pipeline
    @pl.loop(0, n_prime)
    def _(t):
        _start_row(t, idx_smem[t])

    # 3) steady state: wait row t while keeping _DMA_INFLIGHT row copies in flight
    @pl.loop(0, t_tokens)
    def _(t):
        nxt = t + _DMA_INFLIGHT
        # read the next row id BEFORE the wait (.wait() breaks SMEM sst->sld forwarding)
        nxt_row = idx_smem[jnp.minimum(nxt, t_tokens - 1)]
        _wait_row(t)

        @pl.when(nxt < t_tokens)
        def _():
            _start_row(nxt, nxt_row)


def _lookup_dma(flat_idx, table, tile_tokens, vmem_limit_bytes):
    n_pad = flat_idx.shape[0]
    v, d = table.shape
    itemsize = table.dtype.itemsize
    cost = pl.CostEstimate(
        flops=0,
        transcendentals=0,
        bytes_accessed=int(2 * n_pad * d * itemsize + 8 * n_pad),
    )
    return pl.pallas_call(
        _embed_dma_gather_kernel,
        out_shape=jax.ShapeDtypeStruct((n_pad, d), table.dtype),
        grid_spec=pltpu.PrefetchScalarGridSpec(
            num_scalar_prefetch=0,
            grid=(n_pad // tile_tokens,),
            in_specs=[pl.BlockSpec(memory_space=pl.ANY),      # token ids stay in HBM
                      pl.BlockSpec(memory_space=pl.ANY)],     # table stays in HBM
            out_specs=pl.BlockSpec((tile_tokens, d), lambda i: (i, 0)),
            scratch_shapes=[
                pltpu.SMEM((tile_tokens,), jnp.int32),
                pltpu.SemaphoreType.DMA((1,)),
                pltpu.SemaphoreType.DMA((_DMA_INFLIGHT,)),
            ],
        ),
        compiler_params=pltpu.CompilerParams(
            dimension_semantics=("parallel",),
            vmem_limit_bytes=int(vmem_limit_bytes),
        ),
        cost_estimate=cost,
    )(flat_idx, table)


# ---------------------------------------------------------------------------
# Public wrapper (== SingleEmbedder.forward)
# ---------------------------------------------------------------------------
def embedding_lookup(indices, table, *, tile_tokens=None, force_path=None):
    """Pallas TPU embedding gather: table[indices], shape indices.shape + (D,)."""
    lead_shape = indices.shape
    n = int(math.prod(lead_shape)) if lead_shape else 1
    v, d = table.shape

    cfg = _GEN_CONFIG[_tpu_generation()]
    itemsize = table.dtype.itemsize

    # Lane-dense output: pad the embedding dim to a multiple of 128 so the (T, D)
    # output blocks store with full vst instead of masked partial stores.
    d_pad = ((d + 127) // 128) * 128
    if d_pad != d:
        table = jnp.pad(table, ((0, 0), (0, d_pad - d)))

    # dtype-correct sublane multiple for the token axis (f32: 8, bf16: 16, int8/fp8: 32)
    sublane = max(8, 32 // itemsize)
    t_tok = int(tile_tokens) if tile_tokens is not None else int(cfg["tile_tokens"])
    t_tok = max(sublane, min(t_tok, 1024))
    t_tok = (t_tok // sublane) * sublane
    # keep the double-buffered output block comfortably inside the scoped VMEM cap
    while t_tok > sublane and 2 * t_tok * d_pad * itemsize + 4 * _MiB > cfg["scoped_vmem_cap"]:
        t_tok = max(sublane, (t_tok // 2) // sublane * sublane)

    # Out-of-range ids would become out-of-bounds HBM row DMAs -> clamp.
    flat_idx = jnp.clip(indices.reshape(n).astype(jnp.int32), 0, v - 1)
    n_pad = ((n + t_tok - 1) // t_tok) * t_tok
    if n_pad != n:
        flat_idx = jnp.pad(flat_idx, (0, n_pad - n))          # pad with valid id 0

    # Resident-path VMEM accounting: the constant table block is still double-buffered
    # by the pipeline, idx/out blocks are double-buffered, and the (T, V) one-hot plus
    # the (T, D) f32 accumulator are live intermediates.
    table_bytes = v * d_pad * itemsize
    out_tile_bytes = t_tok * d_pad * itemsize
    resident_need = (2 * table_bytes
                     + 2 * (out_tile_bytes + t_tok * 4)
                     + t_tok * v * itemsize                    # (T, V) one-hot
                     + t_tok * d_pad * 4                       # f32 matmul accumulator
                     + 2 * _MiB)                               # headroom

    use_resident = (v <= cfg["onehot_max_vocab"]
                    and 2 * table_bytes <= cfg["resident_2x_budget"]
                    and resident_need <= cfg["scoped_vmem_cap"])
    if force_path == "resident":
        use_resident = True
    elif force_path == "dma":
        use_resident = False

    if use_resident:
        out = _lookup_resident(flat_idx, table, t_tok, cfg["scoped_vmem_cap"])
    else:
        dma_vmem = min(cfg["scoped_vmem_cap"], 2 * out_tile_bytes + 8 * _MiB)
        out = _lookup_dma(flat_idx, table, t_tok, dma_vmem)

    out = out[:n, :d]
    return out.reshape(*lead_shape, d)


def build_embedding_table(key, vocab, emb_size):
    """Deterministically reproduce SingleEmbedder.__init__ weight construction with
    synthetic 'pretrained' embeddings (no file I/O)."""
    # TODO(synk): real module reads pretrained embeddings from a TSV file; host-side
    # I/O has no Pallas equivalent, so synthetic pretrained rows are used here.
    bound = math.sqrt(3.0 / emb_size)
    k_init, k_pre = jax.random.split(key)
    table = jax.random.uniform(
        k_init, (vocab, emb_size), dtype=jnp.float32, minval=-bound, maxval=bound
    )
    indices_matched = jnp.arange(0, vocab, 2)
    indices_missed = jnp.arange(1, vocab, 2)
    pretrained = jax.random.normal(
        k_pre, (indices_matched.shape[0], emb_size), dtype=jnp.float32
    )
    table = table.at[indices_matched].set(pretrained)
    table = table - table[indices_matched].mean(axis=0)   # normalize_embeddings
    table = table.at[indices_missed].set(0.0)
    return table


if __name__ == "__main__":
    key = jax.random.PRNGKey(0)
    k_tab, k_idx = jax.random.split(key)

    # small shapes implied by the forward (args.entrez_size -> vocab, args.emb_size -> D)
    B, S = 2, 8
    VOCAB, EMB = 32, 128

    table = build_embedding_table(k_tab, VOCAB, EMB)
    x = jax.random.randint(k_idx, (B, S), 0, VOCAB, dtype=jnp.int32)
    ref = jnp.take(table, x.reshape(-1), axis=0).reshape(B, S, EMB)

    # Path A: resident table + one-hot MXU gather (auto-selected for this size).
    out_resident = jax.block_until_ready(embedding_lookup(x, table, force_path="resident"))
    assert out_resident.shape == (B, S, EMB)
    assert jnp.allclose(out_resident, ref), "resident-table path mismatch"

    # Path B: table kept in HBM, per-tile SMEM index copy + row DMAs straight into out.
    out_dma = jax.block_until_ready(embedding_lookup(x, table, force_path="dma"))
    assert out_dma.shape == (B, S, EMB)
    assert jnp.allclose(out_dma, ref), "DMA-gather path mismatch"

    # bf16 table exercises the full-rate MXU one-hot path (gather is exact in bf16 too).
    table_bf16 = table.astype(jnp.bfloat16)
    ref_bf16 = jnp.take(table_bf16, x.reshape(-1), axis=0).reshape(B, S, EMB)
    out_bf16 = jax.block_until_ready(embedding_lookup(x, table_bf16))
    assert out_bf16.dtype == jnp.bfloat16
    assert jnp.allclose(out_bf16.astype(jnp.float32),
                        ref_bf16.astype(jnp.float32)), "bf16 resident path mismatch"

    # Non-128-multiple embedding dim exercises the lane-dense padding (DMA path).
    EMB2 = 96
    table96 = jax.random.normal(k_tab, (VOCAB, EMB2), dtype=jnp.float32)
    ref96 = jnp.take(table96, x.reshape(-1), axis=0).reshape(B, S, EMB2)
    out96 = jax.block_until_ready(embedding_lookup(x, table96, force_path="dma"))
    assert out96.shape == (B, S, EMB2)
    assert jnp.allclose(out96, ref96), "padded-D DMA path mismatch"

    print("KERNEL_OK")
</pallas_src>

<mosaic_0001>
module attributes {stable_mosaic.version = 11 : i64} {
  func.func @_embed_onehot_kernel(%arg0: i32, %arg1: memref<512x1xi32, #tpu.memory_space<vmem>>, %arg2: memref<32x128xf32, #tpu.memory_space<vmem>>, %arg3: memref<512x128xf32, #tpu.memory_space<vmem>>) attributes {dimension_semantics = [#tpu.dimension_semantics<parallel>], iteration_bounds = array<i64: 1>, scalar_prefetch = 0 : i64, scratch_operands = 0 : i64, tpu.core_type = #tpu.core_type<tc>, window_params = [{transform_indices = @transform_0, window_bounds = array<i64: 512, 1>}, {pipeline_mode = #tpu.pipeline_mode<synchronous>, transform_indices = @transform_1, window_bounds = array<i64: 32, 128>}, {transform_indices = @transform_2, window_bounds = array<i64: 512, 128>}]} {
    %c0 = arith.constant 0 : index
    %c0_0 = arith.constant 0 : index
    %0 = vector.load %arg1[%c0, %c0_0] : memref<512x1xi32, #tpu.memory_space<vmem>>, vector<512x1xi32>
    %1 = tpu.iota {dimensions = array<i32: 1>} : vector<512x32xi32>
    %2 = vector.broadcast %0 : vector<512x1xi32> to vector<512x32xi32>
    %3 = arith.cmpi eq, %2, %1 : vector<512x32xi32>
    %4 = arith.extui %3 : vector<512x32xi1> to vector<512x32xi32>
    %5 = arith.sitofp %4 : vector<512x32xi32> to vector<512x32xf32>
    %c0_1 = arith.constant 0 : index
    %c0_2 = arith.constant 0 : index
    %6 = vector.load %arg2[%c0_1, %c0_2] : memref<32x128xf32, #tpu.memory_space<vmem>>, vector<32x128xf32>
    %cst = arith.constant dense<0.000000e+00> : vector<512x128xf32>
    %7 = tpu.matmul %5, %6, %cst {dimension_numbers = #tpu.dot_dimension_numbers<[1], [0], [0], [1], [0, 0, 1, 1], [], []>} : vector<512x32xf32>, vector<32x128xf32>, vector<512x128xf32> -> vector<512x128xf32>
    %c0_3 = arith.constant 0 : index
    %c0_4 = arith.constant 0 : index
    %8 = vector.load %arg3[%c0_3, %c0_4] : memref<512x128xf32, #tpu.memory_space<vmem>>, vector<512x128xf32>
    tpu.vector_store %arg3[%c0_3, %c0_4], %7 {strides = array<i32>} : memref<512x128xf32, #tpu.memory_space<vmem>>, vector<512x128xf32>,
    return
  }
  func.func @transform_0(%arg0: i32) -> (i32, i32) {
    %c0_i32 = arith.constant 0 : i32
    %c0_i32_0 = arith.constant 0 : i32
    return %arg0, %c0_i32 : i32, i32
  }
  func.func @transform_1(%arg0: i32) -> (i32, i32) {
    %c0_i32 = arith.constant 0 : i32
    %c0_i32_0 = arith.constant 0 : i32
    %c0_i32_1 = arith.constant 0 : i32
    return %c0_i32, %c0_i32_0 : i32, i32
  }
  func.func @transform_2(%arg0: i32) -> (i32, i32) {
    %c0_i32 = arith.constant 0 : i32
    %c0_i32_0 = arith.constant 0 : i32
    return %arg0, %c0_i32 : i32, i32
  }
}

</mosaic_0001>

<llo_original>
// kernel: tpu_custom_call.1
$region0: #{tpu_custom_call.1}
  #allocation0 [shape = 'u32[]', space=smem, size = 0x4, offset = 0x4, fixed_abs, tag = 'smem constant byte address 0x4 - core index']
  #allocation1 [shape = 'u32[144,128]{1,0:T(1,128)}', space=vmem, size = 0x12000, scoped, tag = 'internal scratch']
  %s0 = inlined_call_operand.hbm [shape: s32[512,1], index: 0, kind: input, shape index: {}]
  %s1 = inlined_call_operand.hbm [shape: f32[32,128], index: 1, kind: input, shape index: {}]
  %s2 = inlined_call_operand.hbm [shape: f32[512,128], index: 2, kind: output, shape index: {}]
  %s3 = sld [smem:[#allocation0]]
  $region26: #{tpu_custom_call.1} parent=0
    _
  %s5 = ssub.s32 1, %s3
  %s6 = scalar_select 0, %s5, %s3
  $region1: #{tpu_custom_call.1} parent=0
    #allocation2 [shape = 'u8[262144]{0}', space=vmem, size = 0x40000, scoped, tag = 'input window, operand 0, single buffered']
    #allocation3 [shape = 's32[1]{0}', space=sflag, size = 0x4, scoped, tag = 'scoped memory for tpu_custom_call.1']
    #allocation4 [shape = 's32[1]{0}', space=sflag, size = 0x4, scoped, tag = 'scoped memory for tpu_custom_call.1']
    #allocation5 [shape = 'u8[16384]{0}', space=vmem, size = 0x4000, scoped, tag = 'input window, operand 1, single buffered']
    #allocation6 [shape = 's32[1]{0}', space=sflag, size = 0x4, scoped, tag = 'scoped memory for tpu_custom_call.1']
    #allocation7 [shape = 'u8[262144]{0}', space=vmem, size = 0x40000, scoped, tag = 'output window, operand 0, single buffered']
    %7 = vsyncpa [#allocation3], 0
    %8 = vsyncpa [#allocation6], 0
    %9 = vsyncpa [#allocation4], 0
    // Predicated region
    $region2: #{tpu_custom_call.1} parent=1 // pred_check
      _
    $region3: #{tpu_custom_call.1} parent=1 // pred_check_branch
      %11 = sbr.rel (0) target = $region5
    $region4: #{tpu_custom_call.1} parent=1 // pred_region
      %s13 = ssub.s32 8192, 8192
      %14 = vsyncadd [#allocation3], %s13
      %s15 = sshll.u32 [#allocation2], 4
      %s16 = int_to_ptr.vmem [resolvable:$true] %s15
      %21 = dma.hbm_to_vmem [thread:$0]  %s0, 8192, %s16, [#allocation3], 128, 128, 8
    $region5: #{tpu_custom_call.1} parent=1 // pred_fallthru
      _
    // Predicated region
    $region6: #{tpu_custom_call.1} parent=1 // pred_check
      _
    $region7: #{tpu_custom_call.1} parent=1 // pred_check_branch
      %23 = sbr.rel (0) target = $region9
    $region8: #{tpu_custom_call.1} parent=1 // pred_region
      %s25 = ssub.s32 512, 512
      %26 = vsyncadd [#allocation6], %s25
      %s27 = sshll.u32 [#allocation5], 4
      %s28 = int_to_ptr.vmem [resolvable:$true] %s27
      %33 = dma.hbm_to_vmem [thread:$0]  %s1, 512, %s28, [#allocation6], 128, 128, 8
    $region9: #{tpu_custom_call.1} parent=1 // pred_fallthru
      _
    // Predicated region
    $region10: #{tpu_custom_call.1} parent=1 // pred_check
      _
    $region11: #{tpu_custom_call.1} parent=1 // pred_check_branch
      %35 = sbr.rel (0) target = $region13
    $region12: #{tpu_custom_call.1} parent=1 // pred_region
      %36 = dma.done [#allocation3], 8192
    $region13: #{tpu_custom_call.1} parent=1 // pred_fallthru
      _
    // Predicated region
    $region14: #{tpu_custom_call.1} parent=1 // pred_check
      _
    $region15: #{tpu_custom_call.1} parent=1 // pred_check_branch
      %38 = sbr.rel (0) target = $region17
    $region16: #{tpu_custom_call.1} parent=1 // pred_region
      %39 = dma.done [#allocation6], 512
    $region17: #{tpu_custom_call.1} parent=1 // pred_fallthru
      _
    %v40 = vld [vmem:[#allocation2] sm:$0xff]
    %v41 = vld [vmem:[#allocation2 + $0x8] sm:$0xff]
    %v42 = vld [vmem:[#allocation2 + $0x10] sm:$0xff]
    %v43 = vld [vmem:[#allocation2 + $0x18] sm:$0xff]
    %v44 = vld [vmem:[#allocation2 + $0x20] sm:$0xff]
    %v45 = vld [vmem:[#allocation2 + $0x28] sm:$0xff]
    %v46 = vld [vmem:[#allocation2 + $0x30] sm:$0xff]
    %v47 = vld [vmem:[#allocation2 + $0x38] sm:$0xff]
    %v48 = vld [vmem:[#allocation2 + $0x40] sm:$0xff]
    %v49 = vld [vmem:[#allocation2 + $0x48] sm:$0xff]
    %v50 = vld [vmem:[#allocation2 + $0x50] sm:$0xff]
    %v51 = vld [vmem:[#allocation2 + $0x58] sm:$0xff]
    %v52 = vld [vmem:[#allocation2 + $0x60] sm:$0xff]
    %v53 = vld [vmem:[#allocation2 + $0x68] sm:$0xff]
    %v54 = vld [vmem:[#allocation2 + $0x70] sm:$0xff]
    %v55 = vld [vmem:[#allocation2 + $0x78] sm:$0xff]
    %v56 = vld [vmem:[#allocation2 + $0x80] sm:$0xff]
    %v57 = vld [vmem:[#allocation2 + $0x88] sm:$0xff]
    %v58 = vld [vmem:[#allocation2 + $0x90] sm:$0xff]
    %v59 = vld [vmem:[#allocation2 + $0x98] sm:$0xff]
    %v60 = vld [vmem:[#allocation2 + $0xa0] sm:$0xff]
    %v61 = vld [vmem:[#allocation2 + $0xa8] sm:$0xff]
    %v62 = vld [vmem:[#allocation2 + $0xb0] sm:$0xff]
    %v63 = vld [vmem:[#allocation2 + $0xb8] sm:$0xff]
    %v64 = vld [vmem:[#allocation2 + $0xc0] sm:$0xff]
    %v65 = vld [vmem:[#allocation2 + $0xc8] sm:$0xff]
    %v66 = vld [vmem:[#allocation2 + $0xd0] sm:$0xff]
    %v67 = vld [vmem:[#allocation2 + $0xd8] sm:$0xff]
    %v68 = vld [vmem:[#allocation2 + $0xe0] sm:$0xff]
    %v69 = vld [vmem:[#allocation2 + $0xe8] sm:$0xff]
    %v70 = vld [vmem:[#allocation2 + $0xf0] sm:$0xff]
    %v71 = vld [vmem:[#allocation2 + $0xf8] sm:$0xff]
    %v72 = vld [vmem:[#allocation2 + $0x100] sm:$0xff]
    %v73 = vld [vmem:[#allocation2 + $0x108] sm:$0xff]
    %v74 = vld [vmem:[#allocation2 + $0x110] sm:$0xff]
    %v75 = vld [vmem:[#allocation2 + $0x118] sm:$0xff]
    %v76 = vld [vmem:[#allocation2 + $0x120] sm:$0xff]
    %v77 = vld [vmem:[#allocation2 + $0x128] sm:$0xff]
    %v78 = vld [vmem:[#allocation2 + $0x130] sm:$0xff]
    %v79 = vld [vmem:[#allocation2 + $0x138] sm:$0xff]
    %v80 = vld [vmem:[#allocation2 + $0x140] sm:$0xff]
    %v81 = vld [vmem:[#allocation2 + $0x148] sm:$0xff]
    %v82 = vld [vmem:[#allocation2 + $0x150] sm:$0xff]
    %v83 = vld [vmem:[#allocation2 + $0x158] sm:$0xff]
    %v84 = vld [vmem:[#allocation2 + $0x160] sm:$0xff]
    %v85 = vld [vmem:[#allocation2 + $0x168] sm:$0xff]
    %v86 = vld [vmem:[#allocation2 + $0x170] sm:$0xff]
    %v87 = vld [vmem:[#allocation2 + $0x178] sm:$0xff]
    %v88 = vld [vmem:[#allocation2 + $0x180] sm:$0xff]
    %v89 = vld [vmem:[#allocation2 + $0x188] sm:$0xff]
    %v90 = vld [vmem:[#allocation2 + $0x190] sm:$0xff]
    %v91 = vld [vmem:[#allocation2 + $0x198] sm:$0xff]
    %v92 = vld [vmem:[#allocation2 + $0x1a0] sm:$0xff]
    %v93 = vld [vmem:[#allocation2 + $0x1a8] sm:$0xff]
    %v94 = vld [vmem:[#allocation2 + $0x1b0] sm:$0xff]
    %v95 = vld [vmem:[#allocation2 + $0x1b8] sm:$0xff]
    %v96 = vld [vmem:[#allocation2 + $0x1c0] sm:$0xff]
    %v97 = vld [vmem:[#allocation2 + $0x1c8] sm:$0xff]
    %v98 = vld [vmem:[#allocation2 + $0x1d0] sm:$0xff]
    %v99 = vld [vmem:[#allocation2 + $0x1d8] sm:$0xff]
    %v100 = vld [vmem:[#allocation2 + $0x1e0] sm:$0xff]
    %v101 = vld [vmem:[#allocation2 + $0x1e8] sm:$0xff]
    %v102 = vld [vmem:[#allocation2 + $0x1f0] sm:$0xff]
    %v103 = vld [vmem:[#allocation2 + $0x1f8] sm:$0xff]
    %v104 = vlaneseq
    %v105 = vand.u32 %v104, 127
    %106 = vset.pattern.permute.xlu0 0
    %107 = vperm.xlu0 %106, %v40
    %v108 = vpop.permute.xlu0 %107
    %109 = vset.pattern.permute.xlu0 0
    %110 = vperm.xlu0 %109, %v41
    %v111 = vpop.permute.xlu0 %110
    %112 = vset.pattern.permute.xlu0 0
    %113 = vperm.xlu0 %112, %v42
    %v114 = vpop.permute.xlu0 %113
    %115 = vset.pattern.permute.xlu0 0
    %116 = vperm.xlu0 %115, %v43
    %v117 = vpop.permute.xlu0 %116
    %118 = vset.pattern.permute.xlu0 0
    %119 = vperm.xlu0 %118, %v44
    %v120 = vpop.permute.xlu0 %119
    %121 = vset.pattern.permute.xlu0 0
    %122 = vperm.xlu0 %121, %v45
    %v123 = vpop.permute.xlu0 %122
    %124 = vset.pattern.permute.xlu0 0
    %125 = vperm.xlu0 %124, %v46
    %v126 = vpop.permute.xlu0 %125
    %127 = vset.pattern.permute.xlu0 0
    %128 = vperm.xlu0 %127, %v47
    %v129 = vpop.permute.xlu0 %128
    %130 = vset.pattern.permute.xlu0 0
    %131 = vperm.xlu0 %130, %v48
    %v132 = vpop.permute.xlu0 %131
    %133 = vset.pattern.permute.xlu0 0
    %134 = vperm.xlu0 %133, %v49
    %v135 = vpop.permute.xlu0 %134
    %136 = vset.pattern.permute.xlu0 0
    %137 = vperm.xlu0 %136, %v50
    %v138 = vpop.permute.xlu0 %137
    %139 = vset.pattern.permute.xlu0 0
    %140 = vperm.xlu0 %139, %v51
    %v141 = vpop.permute.xlu0 %140
    %142 = vset.pattern.permute.xlu0 0
    %143 = vperm.xlu0 %142, %v52
    %v144 = vpop.permute.xlu0 %143
    %145 = vset.pattern.permute.xlu0 0
    %146 = vperm.xlu0 %145, %v53
    %v147 = vpop.permute.xlu0 %146
    %148 = vset.pattern.permute.xlu0 0
    %149 = vperm.xlu0 %148, %v54
    %v150 = vpop.permute.xlu0 %149
    %151 = vset.pattern.permute.xlu0 0
    %152 = vperm.xlu0 %151, %v55
    %v153 = vpop.permute.xlu0 %152
    %154 = vset.pattern.permute.xlu0 0
    %155 = vperm.xlu0 %154, %v56
    %v156 = vpop.permute.xlu0 %155
    %157 = vset.pattern.permute.xlu0 0
    %158 = vperm.xlu0 %157, %v57
    %v159 = vpop.permute.xlu0 %158
    %160 = vset.pattern.permute.xlu0 0
    %161 = vperm.xlu0 %160, %v58
    %v162 = vpop.permute.xlu0 %161
    %163 = vset.pattern.permute.xlu0 0
    %164 = vperm.xlu0 %163, %v59
    %v165 = vpop.permute.xlu0 %164
    %166 = vset.pattern.permute.xlu0 0
    %167 = vperm.xlu0 %166, %v60
    %v168 = vpop.permute.xlu0 %167
    %169 = vset.pattern.permute.xlu0 0
    %170 = vperm.xlu0 %169, %v61
    %v171 = vpop.permute.xlu0 %170
    %172 = vset.pattern.permute.xlu0 0
    %173 = vperm.xlu0 %172, %v62
    %v174 = vpop.permute.xlu0 %173
    %175 = vset.pattern.permute.xlu0 0
    %176 = vperm.xlu0 %175, %v63
    %v177 = vpop.permute.xlu0 %176
    %178 = vset.pattern.permute.xlu0 0
    %179 = vperm.xlu0 %178, %v64
    %v180 = vpop.permute.xlu0 %179
    %181 = vset.pattern.permute.xlu0 0
    %182 = vperm.xlu0 %181, %v65
    %v183 = vpop.permute.xlu0 %182
    %184 = vset.pattern.permute.xlu0 0
    %185 = vperm.xlu0 %184, %v66
    %v186 = vpop.permute.xlu0 %185
    %187 = vset.pattern.permute.xlu0 0
    %188 = vperm.xlu0 %187, %v67
    %v189 = vpop.permute.xlu0 %188
    %190 = vset.pattern.permute.xlu0 0
    %191 = vperm.xlu0 %190, %v68
    %v192 = vpop.permute.xlu0 %191
    %193 = vset.pattern.permute.xlu0 0
    %194 = vperm.xlu0 %193, %v69
    %v195 = vpop.permute.xlu0 %194
    %196 = vset.pattern.permute.xlu0 0
    %197 = vperm.xlu0 %196, %v70
    %v198 = vpop.permute.xlu0 %197
    %199 = vset.pattern.permute.xlu0 0
    %200 = vperm.xlu0 %199, %v71
    %v201 = vpop.permute.xlu0 %200
    %202 = vset.pattern.permute.xlu0 0
    %203 = vperm.xlu0 %202, %v72
    %v204 = vpop.permute.xlu0 %203
    %205 = vset.pattern.permute.xlu0 0
    %206 = vperm.xlu0 %205, %v73
    %v207 = vpop.permute.xlu0 %206
    %208 = vset.pattern.permute.xlu0 0
    %209 = vperm.xlu0 %208, %v74
    %v210 = vpop.permute.xlu0 %209
    %211 = vset.pattern.permute.xlu0 0
    %212 = vperm.xlu0 %211, %v75
    %v213 = vpop.permute.xlu0 %212
    %214 = vset.pattern.permute.xlu0 0
    %215 = vperm.xlu0 %214, %v76
    %v216 = vpop.permute.xlu0 %215
    %217 = vset.pattern.permute.xlu0 0
    %218 = vperm.xlu0 %217, %v77
    %v219 = vpop.permute.xlu0 %218
    %220 = vset.pattern.permute.xlu0 0
    %221 = vperm.xlu0 %220, %v78
    %v222 = vpop.permute.xlu0 %221
    %223 = vset.pattern.permute.xlu0 0
    %224 = vperm.xlu0 %223, %v79
    %v225 = vpop.permute.xlu0 %224
    %226 = vset.pattern.permute.xlu0 0
    %227 = vperm.xlu0 %226, %v80
    %v228 = vpop.permute.xlu0 %227
    %229 = vset.pattern.permute.xlu0 0
    %230 = vperm.xlu0 %229, %v81
    %v231 = vpop.permute.xlu0 %230
    %232 = vset.pattern.permute.xlu0 0
    %233 = vperm.xlu0 %232, %v82
    %v234 = vpop.permute.xlu0 %233
    %235 = vset.pattern.permute.xlu0 0
    %236 = vperm.xlu0 %235, %v83
    %v237 = vpop.permute.xlu0 %236
    %238 = vset.pattern.permute.xlu0 0
    %239 = vperm.xlu0 %238, %v84
    %v240 = vpop.permute.xlu0 %239
    %241 = vset.pattern.permute.xlu0 0
    %242 = vperm.xlu0 %241, %v85
    %v243 = vpop.permute.xlu0 %242
    %244 = vset.pattern.permute.xlu0 0
    %245 = vperm.xlu0 %244, %v86
    %v246 = vpop.permute.xlu0 %245
    %247 = vset.pattern.permute.xlu0 0
    %248 = vperm.xlu0 %247, %v87
    %v249 = vpop.permute.xlu0 %248
    %250 = vset.pattern.permute.xlu0 0
    %251 = vperm.xlu0 %250, %v88
    %v252 = vpop.permute.xlu0 %251
    %253 = vset.pattern.permute.xlu0 0
    %254 = vperm.xlu0 %253, %v89
    %v255 = vpop.permute.xlu0 %254
    %256 = vset.pattern.permute.xlu0 0
    %257 = vperm.xlu0 %256, %v90
    %v258 = vpop.permute.xlu0 %257
    %259 = vset.pattern.permute.xlu0 0
    %260 = vperm.xlu0 %259, %v91
    %v261 = vpop.permute.xlu0 %260
    %262 = vset.pattern.permute.xlu0 0
    %263 = vperm.xlu0 %262, %v92
    %v264 = vpop.permute.xlu0 %263
    %265 = vset.pattern.permute.xlu0 0
    %266 = vperm.xlu0 %265, %v93
    %v267 = vpop.permute.xlu0 %266
    %268 = vset.pattern.permute.xlu0 0
    %269 = vperm.xlu0 %268, %v94
    %v270 = vpop.permute.xlu0 %269
    %271 = vset.pattern.permute.xlu0 0
    %272 = vperm.xlu0 %271, %v95
    %v273 = vpop.permute.xlu0 %272
    %274 = vset.pattern.permute.xlu0 0
    %275 = vperm.xlu0 %274, %v96
    %v276 = vpop.permute.xlu0 %275
    %277 = vset.pattern.permute.xlu0 0
    %278 = vperm.xlu0 %277, %v97
    %v279 = vpop.permute.xlu0 %278
    %280 = vset.pattern.permute.xlu0 0
    %281 = vperm.xlu0 %280, %v98
    %v282 = vpop.permute.xlu0 %281
    %283 = vset.pattern.permute.xlu0 0
    %284 = vperm.xlu0 %283, %v99
    %v285 = vpop.permute.xlu0 %284
    %286 = vset.pattern.permute.xlu0 0
    %287 = vperm.xlu0 %286, %v100
    %v288 = vpop.permute.xlu0 %287
    %289 = vset.pattern.permute.xlu0 0
    %290 = vperm.xlu0 %289, %v101
    %v291 = vpop.permute.xlu0 %290
    %292 = vset.pattern.permute.xlu0 0
    %293 = vperm.xlu0 %292, %v102
    %v294 = vpop.permute.xlu0 %293
    %295 = vset.pattern.permute.xlu0 0
    %296 = vperm.xlu0 %295, %v103
    %v297 = vpop.permute.xlu0 %296
    %vm298 = vcmp.eq.s32.totalorder %v108, %v105
    %vm299 = vcmp.eq.s32.totalorder %v111, %v105
    %vm300 = vcmp.eq.s32.totalorder %v114, %v105
    %vm301 = vcmp.eq.s32.totalorder %v117, %v105
    %vm302 = vcmp.eq.s32.totalorder %v120, %v105
    %vm303 = vcmp.eq.s32.totalorder %v123, %v105
    %vm304 = vcmp.eq.s32.totalorder %v126, %v105
    %vm305 = vcmp.eq.s32.totalorder %v129, %v105
    %vm306 = vcmp.eq.s32.totalorder %v132, %v105
    %vm307 = vcmp.eq.s32.totalorder %v135, %v105
    %vm308 = vcmp.eq.s32.totalorder %v138, %v105
    %vm309 = vcmp.eq.s32.totalorder %v141, %v105
    %vm310 = vcmp.eq.s32.totalorder %v144, %v105
    %vm311 = vcmp.eq.s32.totalorder %v147, %v105
    %vm312 = vcmp.eq.s32.totalorder %v150, %v105
    %vm313 = vcmp.eq.s32.totalorder %v153, %v105
    %vm314 = vcmp.eq.s32.totalorder %v156, %v105
    %vm315 = vcmp.eq.s32.totalorder %v159, %v105
    %vm316 = vcmp.eq.s32.totalorder %v162, %v105
    %vm317 = vcmp.eq.s32.totalorder %v165, %v105
    %vm318 = vcmp.eq.s32.totalorder %v168, %v105
    %vm319 = vcmp.eq.s32.totalorder %v171, %v105
    %vm320 = vcmp.eq.s32.totalorder %v174, %v105
    %vm321 = vcmp.eq.s32.totalorder %v177, %v105
    %vm322 = vcmp.eq.s32.totalorder %v180, %v105
    %vm323 = vcmp.eq.s32.totalorder %v183, %v105
    %vm324 = vcmp.eq.s32.totalorder %v186, %v105
    %vm325 = vcmp.eq.s32.totalorder %v189, %v105
    %vm326 = vcmp.eq.s32.totalorder %v192, %v105
    %vm327 = vcmp.eq.s32.totalorder %v195, %v105
    %vm328 = vcmp.eq.s32.totalorder %v198, %v105
    %vm329 = vcmp.eq.s32.totalorder %v201, %v105
    %vm330 = vcmp.eq.s32.totalorder %v204, %v105
    %vm331 = vcmp.eq.s32.totalorder %v207, %v105
    %vm332 = vcmp.eq.s32.totalorder %v210, %v105
    %vm333 = vcmp.eq.s32.totalorder %v213, %v105
    %vm334 = vcmp.eq.s32.totalorder %v216, %v105
    %vm335 = vcmp.eq.s32.totalorder %v219, %v105
    %vm336 = vcmp.eq.s32.totalorder %v222, %v105
    %vm337 = vcmp.eq.s32.totalorder %v225, %v105
    %vm338 = vcmp.eq.s32.totalorder %v228, %v105
    %vm339 = vcmp.eq.s32.totalorder %v231, %v105
    %vm340 = vcmp.eq.s32.totalorder %v234, %v105
    %vm341 = vcmp.eq.s32.totalorder %v237, %v105
    %vm342 = vcmp.eq.s32.totalorder %v240, %v105
    %vm343 = vcmp.eq.s32.totalorder %v243, %v105
    %vm344 = vcmp.eq.s32.totalorder %v246, %v105
    %vm345 = vcmp.eq.s32.totalorder %v249, %v105
    %vm346 = vcmp.eq.s32.totalorder %v252, %v105
    %vm347 = vcmp.eq.s32.totalorder %v255, %v105
    %vm348 = vcmp.eq.s32.totalorder %v258, %v105
    %vm349 = vcmp.eq.s32.totalorder %v261, %v105
    %vm350 = vcmp.eq.s32.totalorder %v264, %v105
    %vm351 = vcmp.eq.s32.totalorder %v267, %v105
    %vm352 = vcmp.eq.s32.totalorder %v270, %v105
    %vm353 = vcmp.eq.s32.totalorder %v273, %v105
    %vm354 = vcmp.eq.s32.totalorder %v276, %v105
    %vm355 = vcmp.eq.s32.totalorder %v279, %v105
    %vm356 = vcmp.eq.s32.totalorder %v282, %v105
    %vm357 = vcmp.eq.s32.totalorder %v285, %v105
    %vm358 = vcmp.eq.s32.totalorder %v288, %v105
    %vm359 = vcmp.eq.s32.totalorder %v291, %v105
    %vm360 = vcmp.eq.s32.totalorder %v294, %v105
    %vm361 = vcmp.eq.s32.totalorder %v297, %v105
    %v362 = vsel %vm298, 1, 0
    %v363 = vsel %vm299, 1, 0
    %v364 = vsel %vm300, 1, 0
    %v365 = vsel %vm301, 1, 0
    %v366 = vsel %vm302, 1, 0
    %v367 = vsel %vm303, 1, 0
    %v368 = vsel %vm304, 1, 0
    %v369 = vsel %vm305, 1, 0
    %v370 = vsel %vm306, 1, 0
    %v371 = vsel %vm307, 1, 0
    %v372 = vsel %vm308, 1, 0
    %v373 = vsel %vm309, 1, 0
    %v374 = vsel %vm310, 1, 0
    %v375 = vsel %vm311, 1, 0
    %v376 = vsel %vm312, 1, 0
    %v377 = vsel %vm313, 1, 0
    %v378 = vsel %vm314, 1, 0
    %v379 = vsel %vm315, 1, 0
    %v380 = vsel %vm316, 1, 0
    %v381 = vsel %vm317, 1, 0
    %v382 = vsel %vm318, 1, 0
    %v383 = vsel %vm319, 1, 0
    %v384 = vsel %vm320, 1, 0
    %v385 = vsel %vm321, 1, 0
    %v386 = vsel %vm322, 1, 0
    %v387 = vsel %vm323, 1, 0
    %v388 = vsel %vm324, 1, 0
    %v389 = vsel %vm325, 1, 0
    %v390 = vsel %vm326, 1, 0
    %v391 = vsel %vm327, 1, 0
    %v392 = vsel %vm328, 1, 0
    %v393 = vsel %vm329, 1, 0
    %v394 = vsel %vm330, 1, 0
    %v395 = vsel %vm331, 1, 0
    %v396 = vsel %vm332, 1, 0
    %v397 = vsel %vm333, 1, 0
    %v398 = vsel %vm334, 1, 0
    %v399 = vsel %vm335, 1, 0
    %v400 = vsel %vm336, 1, 0
    %v401 = vsel %vm337, 1, 0
    %v402 = vsel %vm338, 1, 0
    %v403 = vsel %vm339, 1, 0
    %v404 = vsel %vm340, 1, 0
    %v405 = vsel %vm341, 1, 0
    %v406 = vsel %vm342, 1, 0
    %v407 = vsel %vm343, 1, 0
    %v408 = vsel %vm344, 1, 0
    %v409 = vsel %vm345, 1, 0
    %v410 = vsel %vm346, 1, 0
    %v411 = vsel %vm347, 1, 0
    %v412 = vsel %vm348, 1, 0
    %v413 = vsel %vm349, 1, 0
    %v414 = vsel %vm350, 1, 0
    %v415 = vsel %vm351, 1, 0
    %v416 = vsel %vm352, 1, 0
    %v417 = vsel %vm353, 1, 0
    %v418 = vsel %vm354, 1, 0
    %v419 = vsel %vm355, 1, 0
    %v420 = vsel %vm356, 1, 0
    %v421 = vsel %vm357, 1, 0
    %v422 = vsel %vm358, 1, 0
    %v423 = vsel %vm359, 1, 0
    %v424 = vsel %vm360, 1, 0
    %v425 = vsel %vm361, 1, 0
    %v426 = vcvt.s32.f32 %v362
    %v427 = vcvt.s32.f32 %v363
    %v428 = vcvt.s32.f32 %v364
    %v429 = vcvt.s32.f32 %v365
    %v430 = vcvt.s32.f32 %v366
    %v431 = vcvt.s32.f32 %v367
    %v432 = vcvt.s32.f32 %v368
    %v433 = vcvt.s32.f32 %v369
    %v434 = vcvt.s32.f32 %v370
    %v435 = vcvt.s32.f32 %v371
    %v436 = vcvt.s32.f32 %v372
    %v437 = vcvt.s32.f32 %v373
    %v438 = vcvt.s32.f32 %v374
    %v439 = vcvt.s32.f32 %v375
    %v440 = vcvt.s32.f32 %v376
    %v441 = vcvt.s32.f32 %v377
    %v442 = vcvt.s32.f32 %v378
    %v443 = vcvt.s32.f32 %v379
    %v444 = vcvt.s32.f32 %v380
    %v445 = vcvt.s32.f32 %v381
    %v446 = vcvt.s32.f32 %v382
    %v447 = vcvt.s32.f32 %v383
    %v448 = vcvt.s32.f32 %v384
    %v449 = vcvt.s32.f32 %v385
    %v450 = vcvt.s32.f32 %v386
    %v451 = vcvt.s32.f32 %v387
    %v452 = vcvt.s32.f32 %v388
    %v453 = vcvt.s32.f32 %v389
    %v454 = vcvt.s32.f32 %v390
    %v455 = vcvt.s32.f32 %v391
    %v456 = vcvt.s32.f32 %v392
    %v457 = vcvt.s32.f32 %v393
    %v458 = vcvt.s32.f32 %v394
    %v459 = vcvt.s32.f32 %v395
    %v460 = vcvt.s32.f32 %v396
    %v461 = vcvt.s32.f32 %v397
    %v462 = vcvt.s32.f32 %v398
    %v463 = vcvt.s32.f32 %v399
    %v464 = vcvt.s32.f32 %v400
    %v465 = vcvt.s32.f32 %v401
    %v466 = vcvt.s32.f32 %v402
    %v467 = vcvt.s32.f32 %v403
    %v468 = vcvt.s32.f32 %v404
    %v469 = vcvt.s32.f32 %v405
    %v470 = vcvt.s32.f32 %v406
    %v471 = vcvt.s32.f32 %v407
    %v472 = vcvt.s32.f32 %v408
    %v473 = vcvt.s32.f32 %v409
    %v474 = vcvt.s32.f32 %v410
    %v475 = vcvt.s32.f32 %v411
    %v476 = vcvt.s32.f32 %v412
    %v477 = vcvt.s32.f32 %v413
    %v478 = vcvt.s32.f32 %v414
    %v479 = vcvt.s32.f32 %v415
    %v480 = vcvt.s32.f32 %v416
    %v481 = vcvt.s32.f32 %v417
    %v482 = vcvt.s32.f32 %v418
    %v483 = vcvt.s32.f32 %v419
    %v484 = vcvt.s32.f32 %v420
    %v485 = vcvt.s32.f32 %v421
    %v486 = vcvt.s32.f32 %v422
    %v487 = vcvt.s32.f32 %v423
    %v488 = vcvt.s32.f32 %v424
    %v489 = vcvt.s32.f32 %v425
    %v490 = vld [vmem:[#allocation5] sm:$0xff]
    %v491 = vld [vmem:[#allocation5 + $0x8] sm:$0xff]
    %v492 = vld [vmem:[#allocation5 + $0x10] sm:$0xff]
    %v493 = vld [vmem:[#allocation5 + $0x18] sm:$0xff]
    %vm494 = vcmask 261120
    %v496 = vsel %vm494, %v426, 0
    %v499 = vsel %vm494, %v427, 0
    %v502 = vsel %vm494, %v428, 0
    %v505 = vsel %vm494, %v429, 0
    %v508 = vsel %vm494, %v430, 0
    %v511 = vsel %vm494, %v431, 0
    %v514 = vsel %vm494, %v432, 0
    %v517 = vsel %vm494, %v433, 0
    %v520 = vsel %vm494, %v434, 0
    %v523 = vsel %vm494, %v435, 0
    %v526 = vsel %vm494, %v436, 0
    %v529 = vsel %vm494, %v437, 0
    %v532 = vsel %vm494, %v438, 0
    %v535 = vsel %vm494, %v439, 0
    %v538 = vsel %vm494, %v440, 0
    %v541 = vsel %vm494, %v441, 0
    %v544 = vsel %vm494, %v442, 0
    %v547 = vsel %vm494, %v443, 0
    %v550 = vsel %vm494, %v444, 0
    %v553 = vsel %vm494, %v445, 0
    %v556 = vsel %vm494, %v446, 0
    %v559 = vsel %vm494, %v447, 0
    %v562 = vsel %vm494, %v448, 0
    %v565 = vsel %vm494, %v449, 0
    %v568 = vsel %vm494, %v450, 0
    %v571 = vsel %vm494, %v451, 0
    %v574 = vsel %vm494, %v452, 0
    %v577 = vsel %vm494, %v453, 0
    %v580 = vsel %vm494, %v454, 0
    %v583 = vsel %vm494, %v455, 0
    %v586 = vsel %vm494, %v456, 0
    %v589 = vsel %vm494, %v457, 0
    %v592 = vsel %vm494, %v458, 0
    %v595 = vsel %vm494, %v459, 0
    %v598 = vsel %vm494, %v460, 0
    %v601 = vsel %vm494, %v461, 0
    %v604 = vsel %vm494, %v462, 0
    %v607 = vsel %vm494, %v463, 0
    %v610 = vsel %vm494, %v464, 0
    %v613 = vsel %vm494, %v465, 0
    %v616 = vsel %vm494, %v466, 0
    %v619 = vsel %vm494, %v467, 0
    %v622 = vsel %vm494, %v468, 0
    %v625 = vsel %vm494, %v469, 0
    %v628 = vsel %vm494, %v470, 0
    %v631 = vsel %vm494, %v471, 0
    %v634 = vsel %vm494, %v472, 0
    %v637 = vsel %vm494, %v473, 0
    %v640 = vsel %vm494, %v474, 0
    %v643 = vsel %vm494, %v475, 0
    %v646 = vsel %vm494, %v476, 0
    %v649 = vsel %vm494, %v477, 0
    %v652 = vsel %vm494, %v478, 0
    %v655 = vsel %vm494, %v479, 0
    %v658 = vsel %vm494, %v480, 0
    %v661 = vsel %vm494, %v481, 0
    %v664 = vsel %vm494, %v482, 0
    %v667 = vsel %vm494, %v483, 0
    %v670 = vsel %vm494, %v484, 0
    %v673 = vsel %vm494, %v485, 0
    %v676 = vsel %vm494, %v486, 0
    %v679 = vsel %vm494, %v487, 0
    %v682 = vsel %vm494, %v488, 0
    %v685 = vsel %vm494, %v489, 0
    %687 = vmatprep.subr.mxu0 0.0
    %688 = vmatpush1.msra.mxu0 %v490
    %689 = vmatprep.subr.mxu0 0.0
    %690 = vmatpush1.msra.mxu0 %v491
    %691 = vmatprep.subr.mxu0 0.0
    %692 = vmatpush1.msra.mxu0 %v492
    %693 = vmatprep.subr.mxu0 0.0
    %694 = vmatpush1.msra.mxu0 %v493
    %695 = vmatprep.subr.mxu0 0.0
    %696 = vmatpush1.msra.mxu0 0.0
    %697 = vmatprep.subr.mxu0 0.0
    %698 = vmatpush1.msra.mxu0 0.0
    %699 = vmatprep.subr.mxu0 0.0
    %700 = vmatpush1.msra.mxu0 0.0
    %701 = vmatprep.subr.mxu0 0.0
    %702 = vmatpush1.msra.mxu0 0.0
    %703 = vmatprep.subr.mxu0 0.0
    %704 = vmatpush1.msra.mxu0 0.0
    %705 = vmatprep.subr.mxu0 0.0
    %706 = vmatpush1.msra.mxu0 0.0
    %707 = vmatprep.subr.mxu0 0.0
    %708 = vmatpush1.msra.mxu0 0.0
    %709 = vmatprep.subr.mxu0 0.0
    %710 = vmatpush1.msra.mxu0 0.0
    %711 = vmatprep.subr.mxu0 0.0
    %712 = vmatpush1.msra.mxu0 0.0
    %713 = vmatprep.subr.mxu0 0.0
    %714 = vmatpush1.msra.mxu0 0.0
    %715 = vmatprep.subr.mxu0 0.0
    %716 = vmatpush1.msra.mxu0 0.0
    %717 = vmatprep.subr.mxu0 0.0
    %718 = vmatpush1.msra.mxu0 0.0
    %719 = vmatprep.subr.mxu0 0.0
    %720 = vmatpush1.msra.mxu0 0.0
    %721 = vmatprep.subr.mxu0 0.0
    %722 = vmatpush1.msra.mxu0 0.0
    %723 = vmatprep.subr.mxu0 0.0
    %724 = vmatpush1.msra.mxu0 0.0
    %725 = vmatprep.subr.mxu0 0.0
    %726 = vmatpush1.msra.mxu0 0.0
    %727 = vmatprep.subr.mxu0 0.0
    %728 = vmatpush1.msra.mxu0 0.0
    %729 = vmatprep.subr.mxu0 0.0
    %730 = vmatpush1.msra.mxu0 0.0
    %731 = vmatprep.subr.mxu0 0.0
    %732 = vmatpush1.msra.mxu0 0.0
    %733 = vmatprep.subr.mxu0 0.0
    %734 = vmatpush1.msra.mxu0 0.0
    %735 = vmatprep.subr.mxu0 0.0
    %736 = vmatpush1.msra.mxu0 0.0
    %737 = vmatprep.subr.mxu0 0.0
    %738 = vmatpush1.msra.mxu0 0.0
    %739 = vmatprep.subr.mxu0 0.0
    %740 = vmatpush1.msra.mxu0 0.0
    %741 = vmatprep.subr.mxu0 0.0
    %742 = vmatpush1.msra.mxu0 0.0
    %743 = vmatprep.subr.mxu0 0.0
    %744 = vmatpush1.msra.mxu0 0.0
    %745 = vmatprep.subr.mxu0 0.0
    %746 = vmatpush1.msra.mxu0 0.0
    %747 = vmatprep.subr.mxu0 0.0
    %748 = vmatpush1.msra.mxu0 0.0
    %749 = vmatprep.subr.mxu0 0.0
    %750 = vmatpush1.msra.mxu0 0.0
    %751 = vmatprep.mubr.f32.mxu0 0.0
    %752 = vmatmul.mubr.f32.gmra.mrb[0].mxu0 %v496
    %v753 = vpop.f32.mrb[0].mxu0
    %v754 = vadd.f32 0.0, %v753
    %v755 = vpop.f32.mrb[0].mxu0
    %756 = vmatprep.mubr.f32.mxu0 0.0
    %757 = vmatmul.mubr.f32.gmra.mrb[0].mxu0 %v499
    %v758 = vpop.f32.mrb[0].mxu0
    %v759 = vadd.f32 0.0, %v758
    %v760 = vpop.f32.mrb[0].mxu0
    %761 = vmatprep.mubr.f32.mxu0 0.0
    %762 = vmatmul.mubr.f32.gmra.mrb[0].mxu0 %v502
    %v763 = vpop.f32.mrb[0].mxu0
    %v764 = vadd.f32 0.0, %v763
    %v765 = vpop.f32.mrb[0].mxu0
    %766 = vmatprep.mubr.f32.mxu0 0.0
    %767 = vmatmul.mubr.f32.gmra.mrb[0].mxu0 %v505
    %v768 = vpop.f32.mrb[0].mxu0
    %v769 = vadd.f32 0.0, %v768
    %v770 = vpop.f32.mrb[0].mxu0
    %771 = vmatprep.mubr.f32.mxu0 0.0
    %772 = vmatmul.mubr.f32.gmra.mrb[0].mxu0 %v508
    %v773 = vpop.f32.mrb[0].mxu0
    %v774 = vadd.f32 0.0, %v773
    %v775 = vpop.f32.mrb[0].mxu0
    %776 = vmatprep.mubr.f32.mxu0 0.0
    %777 = vmatmul.mubr.f32.gmra.mrb[0].mxu0 %v511
    %v778 = vpop.f32.mrb[0].mxu0
    %v779 = vadd.f32 0.0, %v778
    %v780 = vpop.f32.mrb[0].mxu0
    %781 = vmatprep.mubr.f32.mxu0 0.0
    %782 = vmatmul.mubr.f32.gmra.mrb[0].mxu0 %v514
    %v783 = vpop.f32.mrb[0].mxu0
    %v784 = vadd.f32 0.0, %v783
    %v785 = vpop.f32.mrb[0].mxu0
    %786 = vmatprep.mubr.f32.mxu0 0.0
    %787 = vmatmul.mubr.f32.gmra.mrb[0].mxu0 %v517
    %v788 = vpop.f32.mrb[0].mxu0
    %v789 = vadd.f32 0.0, %v788
    %v790 = vpop.f32.mrb[0].mxu0
    %791 = vmatprep.mubr.f32.mxu0 0.0
    %792 = vmatmul.mubr.f32.gmra.mrb[0].mxu0 %v520
    %v793 = vpop.f32.mrb[0].mxu0
    %v794 = vadd.f32 0.0, %v793
    %v795 = vpop.f32.mrb[0].mxu0
    %796 = vmatprep.mubr.f32.mxu0 0.0
    %797 = vmatmul.mubr.f32.gmra.mrb[0].mxu0 %v523
    %v798 = vpop.f32.mrb[0].mxu0
    %v799 = vadd.f32 0.0, %v798
    %v800 = vpop.f32.mrb[0].mxu0
    %801 = vmatprep.mubr.f32.mxu0 0.0
    %802 = vmatmul.mubr.f32.gmra.mrb[0].mxu0 %v526
    %v803 = vpop.f32.mrb[0].mxu0
    %v804 = vadd.f32 0.0, %v803
    %v805 = vpop.f32.mrb[0].mxu0
    %806 = vmatprep.mubr.f32.mxu0 0.0
    %807 = vmatmul.mubr.f32.gmra.mrb[0].mxu0 %v529
    %v808 = vpop.f32.mrb[0].mxu0
    %v809 = vadd.f32 0.0, %v808
    %v810 = vpop.f32.mrb[0].mxu0
    %811 = vmatprep.mubr.f32.mxu0 0.0
    %812 = vmatmul.mubr.f32.gmra.mrb[0].mxu0 %v532
    %v813 = vpop.f32.mrb[0].mxu0
    %v814 = vadd.f32 0.0, %v813
    %v815 = vpop.f32.mrb[0].mxu0
    %816 = vmatprep.mubr.f32.mxu0 0.0
    %817 = vmatmul.mubr.f32.gmra.mrb[0].mxu0 %v535
    %v818 = vpop.f32.mrb[0].mxu0
    %v819 = vadd.f32 0.0, %v818
    %v820 = vpop.f32.mrb[0].mxu0
    %821 = vmatprep.mubr.f32.mxu0 0.0
    %822 = vmatmul.mubr.f32.gmra.mrb[0].mxu0 %v538
    %v823 = vpop.f32.mrb[0].mxu0
    %v824 = vadd.f32 0.0, %v823
    %v825 = vpop.f32.mrb[0].mxu0
    %826 = vmatprep.mubr.f32.mxu0 0.0
    %827 = vmatmul.mubr.f32.gmra.mrb[0].mxu0 %v541
    %v828 = vpop.f32.mrb[0].mxu0
    %v829 = vadd.f32 0.0, %v828
    %v830 = vpop.f32.mrb[0].mxu0
    %831 = vmatprep.mubr.f32.mxu0 0.0
    %832 = vmatmul.mubr.f32.gmra.mrb[0].mxu0 %v544
    %v833 = vpop.f32.mrb[0].mxu0
    %v834 = vadd.f32 0.0, %v833
    %v835 = vpop.f32.mrb[0].mxu0
    %836 = vmatprep.mubr.f32.mxu0 0.0
    %837 = vmatmul.mubr.f32.gmra.mrb[0].mxu0 %v547
    %v838 = vpop.f32.mrb[0].mxu0
    %v839 = vadd.f32 0.0, %v838
    %v840 = vpop.f32.mrb[0].mxu0
    %841 = vmatprep.mubr.f32.mxu0 0.0
    %842 = vmatmul.mubr.f32.gmra.mrb[0].mxu0 %v550
    %v843 = vpop.f32.mrb[0].mxu0
    %v844 = vadd.f32 0.0, %v843
    %v845 = vpop.f32.mrb[0].mxu0
    %846 = vmatprep.mubr.f32.mxu0 0.0
    %847 = vmatmul.mubr.f32.gmra.mrb[0].mxu0 %v553
    %v848 = vpop.f32.mrb[0].mxu0
    %v849 = vadd.f32 0.0, %v848
    %v850 = vpop.f32.mrb[0].mxu0
    %851 = vmatprep.mubr.f32.mxu0 0.0
    %852 = vmatmul.mubr.f32.gmra.mrb[0].mxu0 %v556
    %v853 = vpop.f32.mrb[0].mxu0
    %v854 = vadd.f32 0.0, %v853
    %v855 = vpop.f32.mrb[0].mxu0
    %856 = vmatprep.mubr.f32.mxu0 0.0
    %857 = vmatmul.mubr.f32.gmra.mrb[0].mxu0 %v559
    %v858 = vpop.f32.mrb[0].mxu0
    %v859 = vadd.f32 0.0, %v858
    %v860 = vpop.f32.mrb[0].mxu0
    %861 = vmatprep.mubr.f32.mxu0 0.0
    %862 = vmatmul.mubr.f32.gmra.mrb[0].mxu0 %v562
    %v863 = vpop.f32.mrb[0].mxu0
    %v864 = vadd.f32 0.0, %v863
    %v865 = vpop.f32.mrb[0].mxu0
    %866 = vmatprep.mubr.f32.mxu0 0.0
    %867 = vmatmul.mubr.f32.gmra.mrb[0].mxu0 %v565
    %v868 = vpop.f32.mrb[0].mxu0
    %v869 = vadd.f32 0.0, %v868
    %v870 = vpop.f32.mrb[0].mxu0
    %871 = vmatprep.mubr.f32.mxu0 0.0
    %872 = vmatmul.mubr.f32.gmra.mrb[0].mxu0 %v568
    %v873 = vpop.f32.mrb[0].mxu0
    %v874 = vadd.f32 0.0, %v873
    %v875 = vpop.f32.mrb[0].mxu0
    %876 = vmatprep.mubr.f32.mxu0 0.0
    %877 = vmatmul.mubr.f32.gmra.mrb[0].mxu0 %v571
    %v878 = vpop.f32.mrb[0].mxu0
    %v879 = vadd.f32 0.0, %v878
    %v880 = vpop.f32.mrb[0].mxu0
    %881 = vmatprep.mubr.f32.mxu0 0.0
    %882 = vmatmul.mubr.f32.gmra.mrb[0].mxu0 %v574
    %v883 = vpop.f32.mrb[0].mxu0
    %v884 = vadd.f32 0.0, %v883
    %v885 = vpop.f32.mrb[0].mxu0
    %886 = vmatprep.mubr.f32.mxu0 0.0
    %887 = vmatmul.mubr.f32.gmra.mrb[0].mxu0 %v577
    %v888 = vpop.f32.mrb[0].mxu0
    %v889 = vadd.f32 0.0, %v888
    %v890 = vpop.f32.mrb[0].mxu0
    %891 = vmatprep.mubr.f32.mxu0 0.0
    %892 = vmatmul.mubr.f32.gmra.mrb[0].mxu0 %v580
    %v893 = vpop.f32.mrb[0].mxu0
    %v894 = vadd.f32 0.0, %v893
    %v895 = vpop.f32.mrb[0].mxu0
    %896 = vmatprep.mubr.f32.mxu0 0.0
    %897 = vmatmul.mubr.f32.gmra.mrb[0].mxu0 %v583
    %v898 = vpop.f32.mrb[0].mxu0
    %v899 = vadd.f32 0.0, %v898
    %v900 = vpop.f32.mrb[0].mxu0
    %901 = vmatprep.mubr.f32.mxu0 0.0
    %902 = vmatmul.mubr.f32.gmra.mrb[0].mxu0 %v586
    %v903 = vpop.f32.mrb[0].mxu0
    %v904 = vadd.f32 0.0, %v903
    %v905 = vpop.f32.mrb[0].mxu0
    %906 = vmatprep.mubr.f32.mxu0 0.0
    %907 = vmatmul.mubr.f32.gmra.mrb[0].mxu0 %v589
    %v908 = vpop.f32.mrb[0].mxu0
    %v909 = vadd.f32 0.0, %v908
    %v910 = vpop.f32.mrb[0].mxu0
    %911 = vmatprep.mubr.f32.mxu0 0.0
    %912 = vmatmul.mubr.f32.gmra.mrb[0].mxu0 %v592
    %v913 = vpop.f32.mrb[0].mxu0
    %v914 = vadd.f32 0.0, %v913
    %v915 = vpop.f32.mrb[0].mxu0
    %916 = vmatprep.mubr.f32.mxu0 0.0
    %917 = vmatmul.mubr.f32.gmra.mrb[0].mxu0 %v595
    %v918 = vpop.f32.mrb[0].mxu0
    %v919 = vadd.f32 0.0, %v918
    %v920 = vpop.f32.mrb[0].mxu0
    %921 = vmatprep.mubr.f32.mxu0 0.0
    %922 = vmatmul.mubr.f32.gmra.mrb[0].mxu0 %v598
    %v923 = vpop.f32.mrb[0].mxu0
    %v924 = vadd.f32 0.0, %v923
    %v925 = vpop.f32.mrb[0].mxu0
    %926 = vmatprep.mubr.f32.mxu0 0.0
    %927 = vmatmul.mubr.f32.gmra.mrb[0].mxu0 %v601
    %v928 = vpop.f32.mrb[0].mxu0
    %v929 = vadd.f32 0.0, %v928
    %v930 = vpop.f32.mrb[0].mxu0
    %931 = vmatprep.mubr.f32.mxu0 0.0
    %932 = vmatmul.mubr.f32.gmra.mrb[0].mxu0 %v604
    %v933 = vpop.f32.mrb[0].mxu0
    %v934 = vadd.f32 0.0, %v933
    %v935 = vpop.f32.mrb[0].mxu0
    %936 = vmatprep.mubr.f32.mxu0 0.0
    %937 = vmatmul.mubr.f32.gmra.mrb[0].mxu0 %v607
    %v938 = vpop.f32.mrb[0].mxu0
    %v939 = vadd.f32 0.0, %v938
    %v940 = vpop.f32.mrb[0].mxu0
    %941 = vmatprep.mubr.f32.mxu0 0.0
    %942 = vmatmul.mubr.f32.gmra.mrb[0].mxu0 %v610
    %v943 = vpop.f32.mrb[0].mxu0
    %v944 = vadd.f32 0.0, %v943
    %v945 = vpop.f32.mrb[0].mxu0
    %946 = vmatprep.mubr.f32.mxu0 0.0
    %947 = vmatmul.mubr.f32.gmra.mrb[0].mxu0 %v613
    %v948 = vpop.f32.mrb[0].mxu0
    %v949 = vadd.f32 0.0, %v948
    %v950 = vpop.f32.mrb[0].mxu0
    %951 = vmatprep.mubr.f32.mxu0 0.0
    %952 = vmatmul.mubr.f32.gmra.mrb[0].mxu0 %v616
    %v953 = vpop.f32.mrb[0].mxu0
    %v954 = vadd.f32 0.0, %v953
    %v955 = vpop.f32.mrb[0].mxu0
    %956 = vmatprep.mubr.f32.mxu0 0.0
    %957 = vmatmul.mubr.f32.gmra.mrb[0].mxu0 %v619
    %v958 = vpop.f32.mrb[0].mxu0
    %v959 = vadd.f32 0.0, %v958
    %v960 = vpop.f32.mrb[0].mxu0
    %961 = vmatprep.mubr.f32.mxu0 0.0
    %962 = vmatmul.mubr.f32.gmra.mrb[0].mxu0 %v622
    %v963 = vpop.f32.mrb[0].mxu0
    %v964 = vadd.f32 0.0, %v963
    %v965 = vpop.f32.mrb[0].mxu0
    %966 = vmatprep.mubr.f32.mxu0 0.0
    %967 = vmatmul.mubr.f32.gmra.mrb[0].mxu0 %v625
    %v968 = vpop.f32.mrb[0].mxu0
    %v969 = vadd.f32 0.0, %v968
    %v970 = vpop.f32.mrb[0].mxu0
    %971 = vmatprep.mubr.f32.mxu0 0.0
    %972 = vmatmul.mubr.f32.gmra.mrb[0].mxu0 %v628
    %v973 = vpop.f32.mrb[0].mxu0
    %v974 = vadd.f32 0.0, %v973
    %v975 = vpop.f32.mrb[0].mxu0
    %976 = vmatprep.mubr.f32.mxu0 0.0
    %977 = vmatmul.mubr.f32.gmra.mrb[0].mxu0 %v631
    %v978 = vpop.f32.mrb[0].mxu0
    %v979 = vadd.f32 0.0, %v978
    %v980 = vpop.f32.mrb[0].mxu0
    %981 = vmatprep.mubr.f32.mxu0 0.0
    %982 = vmatmul.mubr.f32.gmra.mrb[0].mxu0 %v634
    %v983 = vpop.f32.mrb[0].mxu0
    %v984 = vadd.f32 0.0, %v983
    %v985 = vpop.f32.mrb[0].mxu0
    %986 = vmatprep.mubr.f32.mxu0 0.0
    %987 = vmatmul.mubr.f32.gmra.mrb[0].mxu0 %v637
    %v988 = vpop.f32.mrb[0].mxu0
    %v989 = vadd.f32 0.0, %v988
    %v990 = vpop.f32.mrb[0].mxu0
    %991 = vmatprep.mubr.f32.mxu0 0.0
    %992 = vmatmul.mubr.f32.gmra.mrb[0].mxu0 %v640
    %v993 = vpop.f32.mrb[0].mxu0
    %v994 = vadd.f32 0.0, %v993
    %v995 = vpop.f32.mrb[0].mxu0
    %996 = vmatprep.mubr.f32.mxu0 0.0
    %997 = vmatmul.mubr.f32.gmra.mrb[0].mxu0 %v643
    %v998 = vpop.f32.mrb[0].mxu0
    %v999 = vadd.f32 0.0, %v998
    %v1000 = vpop.f32.mrb[0].mxu0
    %1001 = vmatprep.mubr.f32.mxu0 0.0
    %1002 = vmatmul.mubr.f32.gmra.mrb[0].mxu0 %v646
    %v1003 = vpop.f32.mrb[0].mxu0
    %v1004 = vadd.f32 0.0, %v1003
    %v1005 = vpop.f32.mrb[0].mxu0
    %1006 = vmatprep.mubr.f32.mxu0 0.0
    %1007 = vmatmul.mubr.f32.gmra.mrb[0].mxu0 %v649
    %v1008 = vpop.f32.mrb[0].mxu0
    %v1009 = vadd.f32 0.0, %v1008
    %v1010 = vpop.f32.mrb[0].mxu0
    %1011 = vmatprep.mubr.f32.mxu0 0.0
    %1012 = vmatmul.mubr.f32.gmra.mrb[0].mxu0 %v652
    %v1013 = vpop.f32.mrb[0].mxu0
    %v1014 = vadd.f32 0.0, %v1013
    %v1015 = vpop.f32.mrb[0].mxu0
    %1016 = vmatprep.mubr.f32.mxu0 0.0
    %1017 = vmatmul.mubr.f32.gmra.mrb[0].mxu0 %v655
    %v1018 = vpop.f32.mrb[0].mxu0
    %v1019 = vadd.f32 0.0, %v1018
    %v1020 = vpop.f32.mrb[0].mxu0
    %1021 = vmatprep.mubr.f32.mxu0 0.0
    %1022 = vmatmul.mubr.f32.gmra.mrb[0].mxu0 %v658
    %v1023 = vpop.f32.mrb[0].mxu0
    %v1024 = vadd.f32 0.0, %v1023
    %v1025 = vpop.f32.mrb[0].mxu0
    %1026 = vmatprep.mubr.f32.mxu0 0.0
    %1027 = vmatmul.mubr.f32.gmra.mrb[0].mxu0 %v661
    %v1028 = vpop.f32.mrb[0].mxu0
    %v1029 = vadd.f32 0.0, %v1028
    %v1030 = vpop.f32.mrb[0].mxu0
    %1031 = vmatprep.mubr.f32.mxu0 0.0
    %1032 = vmatmul.mubr.f32.gmra.mrb[0].mxu0 %v664
    %v1033 = vpop.f32.mrb[0].mxu0
    %v1034 = vadd.f32 0.0, %v1033
    %v1035 = vpop.f32.mrb[0].mxu0
    %1036 = vmatprep.mubr.f32.mxu0 0.0
    %1037 = vmatmul.mubr.f32.gmra.mrb[0].mxu0 %v667
    %v1038 = vpop.f32.mrb[0].mxu0
    %v1039 = vadd.f32 0.0, %v1038
    %v1040 = vpop.f32.mrb[0].mxu0
    %1041 = vmatprep.mubr.f32.mxu0 0.0
    %1042 = vmatmul.mubr.f32.gmra.mrb[0].mxu0 %v670
    %v1043 = vpop.f32.mrb[0].mxu0
    %v1044 = vadd.f32 0.0, %v1043
    %v1045 = vpop.f32.mrb[0].mxu0
    %1046 = vmatprep.mubr.f32.mxu0 0.0
    %1047 = vmatmul.mubr.f32.gmra.mrb[0].mxu0 %v673
    %v1048 = vpop.f32.mrb[0].mxu0
    %v1049 = vadd.f32 0.0, %v1048
    %v1050 = vpop.f32.mrb[0].mxu0
    %1051 = vmatprep.mubr.f32.mxu0 0.0
    %1052 = vmatmul.mubr.f32.gmra.mrb[0].mxu0 %v676
    %v1053 = vpop.f32.mrb[0].mxu0
    %v1054 = vadd.f32 0.0, %v1053
    %v1055 = vpop.f32.mrb[0].mxu0
    %1056 = vmatprep.mubr.f32.mxu0 0.0
    %1057 = vmatmul.mubr.f32.gmra.mrb[0].mxu0 %v679
    %v1058 = vpop.f32.mrb[0].mxu0
    %v1059 = vadd.f32 0.0, %v1058
    %v1060 = vpop.f32.mrb[0].mxu0
    %1061 = vmatprep.mubr.f32.mxu0 0.0
    %1062 = vmatmul.mubr.f32.gmra.mrb[0].mxu0 %v682
    %v1063 = vpop.f32.mrb[0].mxu0
    %v1064 = vadd.f32 0.0, %v1063
    %v1065 = vpop.f32.mrb[0].mxu0
    %1066 = vmatprep.mubr.f32.mxu0 0.0
    %1067 = vmatmul.mubr.f32.gmra.mrb[0].mxu0 %v685
    %v1068 = vpop.f32.mrb[0].mxu0
    %v1069 = vadd.f32 0.0, %v1068
    %v1070 = vpop.f32.mrb[0].mxu0
    %1071 = vdwg.mxu0
    %1072 = vst [vmem:[#allocation7] sm:$0xff] %v754
    %1073 = vst [vmem:[#allocation7 + $0x8] sm:$0xff] %v759
    %1074 = vst [vmem:[#allocation7 + $0x10] sm:$0xff] %v764
    %1075 = vst [vmem:[#allocation7 + $0x18] sm:$0xff] %v769
    %1076 = vst [vmem:[#allocation7 + $0x20] sm:$0xff] %v774
    %1077 = vst [vmem:[#allocation7 + $0x28] sm:$0xff] %v779
    %1078 = vst [vmem:[#allocation7 + $0x30] sm:$0xff] %v784
    %1079 = vst [vmem:[#allocation7 + $0x38] sm:$0xff] %v789
    %1080 = vst [vmem:[#allocation7 + $0x40] sm:$0xff] %v794
    %1081 = vst [vmem:[#allocation7 + $0x48] sm:$0xff] %v799
    %1082 = vst [vmem:[#allocation7 + $0x50] sm:$0xff] %v804
    %1083 = vst [vmem:[#allocation7 + $0x58] sm:$0xff] %v809
    %1084 = vst [vmem:[#allocation7 + $0x60] sm:$0xff] %v814
    %1085 = vst [vmem:[#allocation7 + $0x68] sm:$0xff] %v819
    %1086 = vst [vmem:[#allocation7 + $0x70] sm:$0xff] %v824
    %1087 = vst [vmem:[#allocation7 + $0x78] sm:$0xff] %v829
    %1088 = vst [vmem:[#allocation7 + $0x80] sm:$0xff] %v834
    %1089 = vst [vmem:[#allocation7 + $0x88] sm:$0xff] %v839
    %1090 = vst [vmem:[#allocation7 + $0x90] sm:$0xff] %v844
    %1091 = vst [vmem:[#allocation7 + $0x98] sm:$0xff] %v849
    %1092 = vst [vmem:[#allocation7 + $0xa0] sm:$0xff] %v854
    %1093 = vst [vmem:[#allocation7 + $0xa8] sm:$0xff] %v859
    %1094 = vst [vmem:[#allocation7 + $0xb0] sm:$0xff] %v864
    %1095 = vst [vmem:[#allocation7 + $0xb8] sm:$0xff] %v869
    %1096 = vst [vmem:[#allocation7 + $0xc0] sm:$0xff] %v874
    %1097 = vst [vmem:[#allocation7 + $0xc8] sm:$0xff] %v879
    %1098 = vst [vmem:[#allocation7 + $0xd0] sm:$0xff] %v884
    %1099 = vst [vmem:[#allocation7 + $0xd8] sm:$0xff] %v889
    %1100 = vst [vmem:[#allocation7 + $0xe0] sm:$0xff] %v894
    %1101 = vst [vmem:[#allocation7 + $0xe8] sm:$0xff] %v899
    %1102 = vst [vmem:[#allocation7 + $0xf0] sm:$0xff] %v904
    %1103 = vst [vmem:[#allocation7 + $0xf8] sm:$0xff] %v909
    %1104 = vst [vmem:[#allocation7 + $0x100] sm:$0xff] %v914
    %1105 = vst [vmem:[#allocation7 + $0x108] sm:$0xff] %v919
    %1106 = vst [vmem:[#allocation7 + $0x110] sm:$0xff] %v924
    %1107 = vst [vmem:[#allocation7 + $0x118] sm:$0xff] %v929
    %1108 = vst [vmem:[#allocation7 + $0x120] sm:$0xff] %v934
    %1109 = vst [vmem:[#allocation7 + $0x128] sm:$0xff] %v939
    %1110 = vst [vmem:[#allocation7 + $0x130] sm:$0xff] %v944
    %1111 = vst [vmem:[#allocation7 + $0x138] sm:$0xff] %v949
    %1112 = vst [vmem:[#allocation7 + $0x140] sm:$0xff] %v954
    %1113 = vst [vmem:[#allocation7 + $0x148] sm:$0xff] %v959
    %1114 = vst [vmem:[#allocation7 + $0x150] sm:$0xff] %v964
    %1115 = vst [vmem:[#allocation7 + $0x158] sm:$0xff] %v969
    %1116 = vst [vmem:[#allocation7 + $0x160] sm:$0xff] %v974
    %1117 = vst [vmem:[#allocation7 + $0x168] sm:$0xff] %v979
    %1118 = vst [vmem:[#allocation7 + $0x170] sm:$0xff] %v984
    %1119 = vst [vmem:[#allocation7 + $0x178] sm:$0xff] %v989
    %1120 = vst [vmem:[#allocation7 + $0x180] sm:$0xff] %v994
    %1121 = vst [vmem:[#allocation7 + $0x188] sm:$0xff] %v999
    %1122 = vst [vmem:[#allocation7 + $0x190] sm:$0xff] %v1004
    %1123 = vst [vmem:[#allocation7 + $0x198] sm:$0xff] %v1009
    %1124 = vst [vmem:[#allocation7 + $0x1a0] sm:$0xff] %v1014
    %1125 = vst [vmem:[#allocation7 + $0x1a8] sm:$0xff] %v1019
    %1126 = vst [vmem:[#allocation7 + $0x1b0] sm:$0xff] %v1024
    %1127 = vst [vmem:[#allocation7 + $0x1b8] sm:$0xff] %v1029
    %1128 = vst [vmem:[#allocation7 + $0x1c0] sm:$0xff] %v1034
    %1129 = vst [vmem:[#allocation7 + $0x1c8] sm:$0xff] %v1039
    %1130 = vst [vmem:[#allocation7 + $0x1d0] sm:$0xff] %v1044
    %1131 = vst [vmem:[#allocation7 + $0x1d8] sm:$0xff] %v1049
    %1132 = vst [vmem:[#allocation7 + $0x1e0] sm:$0xff] %v1054
    %1133 = vst [vmem:[#allocation7 + $0x1e8] sm:$0xff] %v1059
    %1134 = vst [vmem:[#allocation7 + $0x1f0] sm:$0xff] %v1064
    %1135 = vst [vmem:[#allocation7 + $0x1f8] sm:$0xff] %v1069
    // Predicated region
    $region18: #{tpu_custom_call.1} parent=1 // pred_check
      _
    $region19: #{tpu_custom_call.1} parent=1 // pred_check_branch
      %1137 = sbr.rel (0) target = $region21
    $region20: #{tpu_custom_call.1} parent=1 // pred_region
      %s1139 = ssub.s32 8192, 8192
      %1140 = vsyncadd [#allocation4], %s1139
      %s1141 = sshll.u32 [#allocation7], 4
      %s1142 = int_to_ptr.vmem [resolvable:$true] %s1141
      %1147 = dma.vmem_to_hbm [thread:$0]  %s1142, 8192, %s2, [#allocation4], 128, 128, 8
    $region21: #{tpu_custom_call.1} parent=1 // pred_fallthru
      _
    // Predicated region
    $region22: #{tpu_custom_call.1} parent=1 // pred_check
      _
    $region23: #{tpu_custom_call.1} parent=1 // pred_check_branch
      %1149 = sbr.rel (0) target = $region25
    $region24: #{tpu_custom_call.1} parent=1 // pred_region
      %1150 = dma.done [#allocation4], 8192
    $region25: #{tpu_custom_call.1} parent=1 // pred_fallthru
      _
    %1151 = vsyncpa [#allocation3], 1
    %1152 = vsyncpa [#allocation6], 1
    %1153 = vsyncpa [#allocation4], 1

</llo_original>
